<compile_context>
chip_gen: v5e
topology: v5e:2x2
jax: 0.10.0
libtpu: 0.0.40
codegen_flags: <defaults>
</compile_context>

<pallas_src>
import jax
import jax.numpy as jnp
from jax.experimental import pallas as pl
from jax.experimental.pallas import tpu as pltpu


def attention_decoder_kernel(
    # scalar prefetch
    ids_ref,                                     # (B,) int32 token ids (SMEM)
    # inputs
    h_ref, c_ref, ann_ref, emb_hbm,              # activations + HBM embedding table
    w1h_ref, w1a_ref, b1_ref, w2_ref, b2_ref,    # attention params
    wg_ref, bg_ref,                              # fused LSTM gate params
    wout_ref, bout_ref,                          # output-projection tile
    # outputs
    out_ref, hnew_ref, cnew_ref, attn_ref,
    # scratch
    emb_buf, emb_sem,
):
    j = pl.program_id(0)
    B, S, H = ann_ref.shape

    @pl.when(j == 0)
    def _compute_state():
        # ---- embedding gather: DMA only the B required rows from the HBM table ----
        copies = []
        for b in range(B):                        # B is static, unrolled at trace time
            cp = pltpu.make_async_copy(
                emb_hbm.at[pl.ds(ids_ref[b], 1), :],
                emb_buf.at[pl.ds(b, 1), :],
                emb_sem.at[b],
            )
            cp.start()
            copies.append(cp)

        h = h_ref[...]                            # (B, H)
        ann = ann_ref[...]                        # (B, S, H)
        h_bf = h.astype(jnp.bfloat16)

        # ---- attention MLP: Linear(2H->H) split into h-part + annotation-part ----
        t_a = jnp.dot(ann.reshape(B * S, H).astype(jnp.bfloat16), w1a_ref[...],
                      preferred_element_type=jnp.float32).reshape(B, S, H)
        t_h = jnp.dot(h_bf, w1h_ref[...],
                      preferred_element_type=jnp.float32) + b1_ref[...]
        hid1 = jnp.maximum(t_a + t_h[:, None, :], 0.0)          # ReLU, (B, S, H)

        # Linear(H->1) as an MXU matmul: (B*S, H) @ (H, 1) -> (B, S, 1)
        logits = jnp.dot(hid1.reshape(B * S, H).astype(jnp.bfloat16), w2_ref[...],
                         preferred_element_type=jnp.float32).reshape(B, S, 1)
        logits = logits + b2_ref[0, 0]

        # softmax over the sequence dim (nn.Softmax(dim=1)) -> (B, S, 1)
        m = jnp.max(logits, axis=1, keepdims=True)
        e = jnp.exp(logits - m)
        attn = e / jnp.sum(e, axis=1, keepdims=True)
        attn_ref[...] = attn

        # context vector on the MXU: contract over S -> (B, 1, H) -> (B, H)
        context = jnp.einsum("bso,bsh->boh", attn, ann,
                             preferred_element_type=jnp.float32).reshape(B, H)

        # wait for the gathered embedding rows (DMA overlapped with the attention math)
        for cp in copies:
            cp.wait()
        embed = emb_buf[...]                      # (B, H) f32

        # ---- LSTM cell: single fused gate matmul on z = [embed, context, h_prev] ----
        z = jnp.concatenate([embed, context, h], axis=1).astype(jnp.bfloat16)  # (B, 3H)
        gates = jnp.dot(z, wg_ref[...],
                        preferred_element_type=jnp.float32) + bg_ref[...]       # (B, 4H)
        i_g = jax.nn.sigmoid(gates[:, 0 * H:1 * H])
        f_g = jax.nn.sigmoid(gates[:, 1 * H:2 * H])
        g_g = jnp.tanh(gates[:, 2 * H:3 * H])
        o_g = jax.nn.sigmoid(gates[:, 3 * H:4 * H])

        c_new = f_g * c_ref[...] + i_g * g_g
        h_new = o_g * jnp.tanh(c_new)
        cnew_ref[...] = c_new
        hnew_ref[...] = h_new

    # ---- output projection: one vocab tile per grid step, reads resident h_new ----
    out_ref[...] = jnp.dot(hnew_ref[...].astype(jnp.bfloat16), wout_ref[...],
                           preferred_element_type=jnp.float32) + bout_ref[...]


def init_params(key, vocab_size, hidden_size):
    """Deterministic parameter init in PyTorch layouts (weights are (out, in))."""
    V, H = vocab_size, hidden_size
    ks = jax.random.split(key, 10)
    s = 0.1
    raw = {
        "embedding": s * jax.random.normal(ks[0], (V, H), jnp.float32),
        "attn_w1":   s * jax.random.normal(ks[1], (H, 2 * H), jnp.float32),
        "attn_b1":   s * jax.random.normal(ks[2], (H,), jnp.float32),
        "attn_w2":   s * jax.random.normal(ks[3], (1, H), jnp.float32),
        "attn_b2":   s * jax.random.normal(ks[4], (1,), jnp.float32),
        "w_ih":      s * jax.random.normal(ks[5], (4 * H, 2 * H), jnp.float32),
        "w_hh":      s * jax.random.normal(ks[6], (4 * H, H), jnp.float32),
        "b_ih":      s * jax.random.normal(ks[7], (4 * H,), jnp.float32),
        "b_hh":      s * jax.random.normal(ks[8], (4 * H,), jnp.float32),
        "out_w":     s * jax.random.normal(ks[9], (V, H), jnp.float32),
        "out_b":     jnp.zeros((V,), jnp.float32),
    }
    return raw


def pack_kernel_params(raw, hidden_size):
    """Re-layout PyTorch-shaped params into kernel params (bf16 MXU operands)."""
    H = hidden_size
    bf16 = jnp.bfloat16
    p = {}
    p["emb"] = raw["embedding"]                                # (V, H) f32, stays in HBM
    p["w1h"] = raw["attn_w1"][:, :H].T.astype(bf16)            # (H, H)  h-part of Linear(2H->H)
    p["w1a"] = raw["attn_w1"][:, H:].T.astype(bf16)            # (H, H)  annotation-part
    p["b1"] = raw["attn_b1"].reshape(1, H)                     # f32
    p["w2"] = raw["attn_w2"].T.astype(bf16)                    # (H, 1)  Linear(H->1)
    p["b2"] = raw["attn_b2"].reshape(1, 1)                     # f32 scalar -> SMEM
    # Fused LSTM gates (PyTorch order i, f, g, o) acting on z = [embed, context, h_prev].
    w_cols, b_cols = [], []
    for k in range(4):
        wih_k = raw["w_ih"][k * H:(k + 1) * H, :]              # (H, 2H)
        whh_k = raw["w_hh"][k * H:(k + 1) * H, :]              # (H, H)
        w_cols.append(jnp.concatenate([wih_k.T, whh_k.T], axis=0))   # (3H, H)
        b_cols.append(raw["b_ih"][k * H:(k + 1) * H] + raw["b_hh"][k * H:(k + 1) * H])
    p["w_gates"] = jnp.concatenate(w_cols, axis=1).astype(bf16)       # (3H, 4H)
    p["b_gates"] = jnp.concatenate(b_cols).reshape(1, 4 * H)          # (1, 4H) f32
    p["wout"] = raw["out_w"].T.astype(bf16)                    # (H, V)
    p["bout"] = raw["out_b"].reshape(1, -1)                    # (1, V) f32
    return p


def attention_decoder_forward(x, h_prev, c_prev, annotations, kp):
    B, S, H = annotations.shape
    V = kp["emb"].shape[0]
    tn = V if V <= 1024 else 1024            # lane-dense vocab tile (multiple of 128 at scale)
    nj = pl.cdiv(V, tn)
    ids = x.reshape(B).astype(jnp.int32)

    grid_spec = pltpu.PrefetchScalarGridSpec(
        num_scalar_prefetch=1,
        grid=(nj,),
        in_specs=[
            pl.BlockSpec((B, H), lambda j, ids: (0, 0)),            # h_prev
            pl.BlockSpec((B, H), lambda j, ids: (0, 0)),            # c_prev
            pl.BlockSpec((B, S, H), lambda j, ids: (0, 0, 0)),      # annotations
            pl.BlockSpec(memory_space=pl.ANY),                      # embedding table (HBM)
            pl.BlockSpec((H, H), lambda j, ids: (0, 0)),            # w1h
            pl.BlockSpec((H, H), lambda j, ids: (0, 0)),            # w1a
            pl.BlockSpec((1, H), lambda j, ids: (0, 0)),            # b1
            pl.BlockSpec((H, 1), lambda j, ids: (0, 0)),            # w2
            pl.BlockSpec((1, 1), lambda j, ids: (0, 0),
                         memory_space=pltpu.MemorySpace.SMEM),      # b2 scalar
            pl.BlockSpec((3 * H, 4 * H), lambda j, ids: (0, 0)),    # fused gate weights
            pl.BlockSpec((1, 4 * H), lambda j, ids: (0, 0)),        # fused gate bias
            pl.BlockSpec((H, tn), lambda j, ids: (0, j)),           # wout vocab tile
            pl.BlockSpec((1, tn), lambda j, ids: (0, j)),           # bout vocab tile
        ],
        out_specs=(
            pl.BlockSpec((B, tn), lambda j, ids: (0, j)),           # logits tile
            pl.BlockSpec((B, H), lambda j, ids: (0, 0)),            # h_new (resident)
            pl.BlockSpec((B, H), lambda j, ids: (0, 0)),            # c_new (resident)
            pl.BlockSpec((B, S, 1), lambda j, ids: (0, 0, 0)),      # attn (resident)
        ),
        scratch_shapes=[
            pltpu.VMEM((B, H), jnp.float32),      # gathered embedding rows
            pltpu.SemaphoreType.DMA((B,)),        # one DMA semaphore per gathered row
        ],
    )
    out_shapes = (
        jax.ShapeDtypeStruct((B, V), jnp.float32),
        jax.ShapeDtypeStruct((B, H), jnp.float32),
        jax.ShapeDtypeStruct((B, H), jnp.float32),
        jax.ShapeDtypeStruct((B, S, 1), jnp.float32),
    )
    return pl.pallas_call(
        attention_decoder_kernel,
        out_shape=out_shapes,
        grid_spec=grid_spec,
        compiler_params=pltpu.CompilerParams(
            # vocab tiles reuse state computed at step 0 -> sequential axis
            dimension_semantics=("arbitrary",)),
    )(ids, h_prev, c_prev, annotations, kp["emb"],
      kp["w1h"], kp["w1a"], kp["b1"], kp["w2"], kp["b2"],
      kp["w_gates"], kp["b_gates"], kp["wout"], kp["bout"])


def reference_forward(x, h_prev, c_prev, annotations, raw):
    """Pure-JAX (f32) mirror of the PyTorch forward, used for a correctness check."""
    B, S, H = annotations.shape
    emb = raw["embedding"][x[:, 0]]
    exp_h = jnp.broadcast_to(h_prev[:, None, :], (B, S, H))
    concat = jnp.concatenate([exp_h, annotations], axis=2)
    a1 = jnp.maximum(concat @ raw["attn_w1"].T + raw["attn_b1"], 0.0)
    scores = a1 @ raw["attn_w2"].T + raw["attn_b2"]          # (B, S, 1)
    attn = jax.nn.softmax(scores, axis=1)                    # (B, S, 1) == Attention.forward
    context = jnp.sum(attn * annotations, axis=1)
    inp = jnp.concatenate([emb, context], axis=1)
    gates = inp @ raw["w_ih"].T + raw["b_ih"] + h_prev @ raw["w_hh"].T + raw["b_hh"]
    i, f, g, o = jnp.split(gates, 4, axis=1)
    c_new = jax.nn.sigmoid(f) * c_prev + jax.nn.sigmoid(i) * jnp.tanh(g)
    h_new = jax.nn.sigmoid(o) * jnp.tanh(c_new)
    out = h_new @ raw["out_w"].T + raw["out_b"]
    return out, h_new, c_new, attn


if __name__ == "__main__":
    B, S, H, V = 2, 8, 32, 16

    key = jax.random.PRNGKey(0)
    kx, kh, kc, ka, kp_key = jax.random.split(key, 5)

    x = jax.random.randint(kx, (B, 1), 0, V, dtype=jnp.int32)
    h_prev = jax.random.normal(kh, (B, H), jnp.float32)
    c_prev = jax.random.normal(kc, (B, H), jnp.float32)
    annotations = jax.random.normal(ka, (B, S, H), jnp.float32)

    raw = init_params(kp_key, V, H)
    kp = pack_kernel_params(raw, H)

    out, h_new, c_new, attn = attention_decoder_forward(x, h_prev, c_prev, annotations, kp)
    jax.block_until_ready((out, h_new, c_new, attn))

    r_out, r_h, r_c, r_attn = reference_forward(x, h_prev, c_prev, annotations, raw)
    assert out.shape == (B, V) and h_new.shape == (B, H)
    assert c_new.shape == (B, H) and attn.shape == (B, S, 1)
    # bf16 MXU operands with f32 accumulation -> relaxed tolerance vs the f32 reference.
    tol = dict(atol=5e-2, rtol=5e-2)
    assert jnp.allclose(out, r_out, **tol), "output mismatch"
    assert jnp.allclose(h_new, r_h, **tol), "h_new mismatch"
    assert jnp.allclose(c_new, r_c, **tol), "c_new mismatch"
    assert jnp.allclose(attn, r_attn, **tol), "attention mismatch"

    print("KERNEL_OK")
</pallas_src>

<mosaic_0001>
module attributes {stable_mosaic.version = 11 : i64} {
  func.func @attention_decoder_kernel(%arg0: i32, %arg1: memref<2xi32, #tpu.memory_space<smem>>, %arg2: memref<2x32xf32, #tpu.memory_space<vmem>>, %arg3: memref<2x32xf32, #tpu.memory_space<vmem>>, %arg4: memref<2x8x32xf32, #tpu.memory_space<vmem>>, %arg5: memref<16x32xf32, #tpu.memory_space<any>>, %arg6: memref<32x32xbf16, #tpu.memory_space<vmem>>, %arg7: memref<32x32xbf16, #tpu.memory_space<vmem>>, %arg8: memref<1x32xf32, #tpu.memory_space<vmem>>, %arg9: memref<32x1xbf16, #tpu.memory_space<vmem>>, %arg10: memref<1x1xf32, #tpu.memory_space<smem>>, %arg11: memref<96x128xbf16, #tpu.memory_space<vmem>>, %arg12: memref<1x128xf32, #tpu.memory_space<vmem>>, %arg13: memref<32x16xbf16, #tpu.memory_space<vmem>>, %arg14: memref<1x16xf32, #tpu.memory_space<vmem>>, %arg15: memref<2x16xf32, #tpu.memory_space<vmem>>, %arg16: memref<2x32xf32, #tpu.memory_space<vmem>>, %arg17: memref<2x32xf32, #tpu.memory_space<vmem>>, %arg18: memref<2x8x1xf32, #tpu.memory_space<vmem>>, %arg19: memref<2x32xf32, #tpu.memory_space<vmem>>, %arg20: memref<2x!tpu.dma_semaphore, #tpu.memory_space<semaphore_mem>>) attributes {dimension_semantics = [#tpu.dimension_semantics<arbitrary>], iteration_bounds = array<i64: 1>, scalar_prefetch = 1 : i64, scratch_operands = 2 : i64, tpu.core_type = #tpu.core_type<tc>, window_params = [{pipeline_mode = #tpu.pipeline_mode<synchronous>, transform_indices = @transform_0, window_bounds = array<i64: 2, 32>}, {pipeline_mode = #tpu.pipeline_mode<synchronous>, transform_indices = @transform_1, window_bounds = array<i64: 2, 32>}, {pipeline_mode = #tpu.pipeline_mode<synchronous>, transform_indices = @transform_2, window_bounds = array<i64: 2, 8, 32>}, {}, {pipeline_mode = #tpu.pipeline_mode<synchronous>, transform_indices = @transform_4, window_bounds = array<i64: 32, 32>}, {pipeline_mode = #tpu.pipeline_mode<synchronous>, transform_indices = @transform_5, window_bounds = array<i64: 32, 32>}, {pipeline_mode = #tpu.pipeline_mode<synchronous>, transform_indices = @transform_6, window_bounds = array<i64: 1, 32>}, {pipeline_mode = #tpu.pipeline_mode<synchronous>, transform_indices = @transform_7, window_bounds = array<i64: 32, 1>}, {transform_indices = @transform_8, window_bounds = array<i64: 1, 1>}, {pipeline_mode = #tpu.pipeline_mode<synchronous>, transform_indices = @transform_9, window_bounds = array<i64: 96, 128>}, {pipeline_mode = #tpu.pipeline_mode<synchronous>, transform_indices = @transform_10, window_bounds = array<i64: 1, 128>}, {transform_indices = @transform_11, window_bounds = array<i64: 32, 16>}, {transform_indices = @transform_12, window_bounds = array<i64: 1, 16>}, {transform_indices = @transform_13, window_bounds = array<i64: 2, 16>}, {pipeline_mode = #tpu.pipeline_mode<synchronous>, transform_indices = @transform_14, window_bounds = array<i64: 2, 32>}, {pipeline_mode = #tpu.pipeline_mode<synchronous>, transform_indices = @transform_15, window_bounds = array<i64: 2, 32>}, {pipeline_mode = #tpu.pipeline_mode<synchronous>, transform_indices = @transform_16, window_bounds = array<i64: 2, 8, 1>}]} {
    %c0_i32 = arith.constant 0 : i32
    %0 = arith.cmpi eq, %arg0, %c0_i32 : i32
    %1 = arith.extui %0 : i1 to i32
    %c0_i32_0 = arith.constant 0 : i32
    %2 = arith.cmpi ne, %1, %c0_i32_0 : i32
    scf.if %2 {
      %c0_8 = arith.constant 0 : index
      %11 = memref.load %arg1[%c0_8] : memref<2xi32, #tpu.memory_space<smem>>
      %c0_i32_9 = arith.constant 0 : i32
      %c0_i32_10 = arith.constant 0 : i32
      %12 = tpu.memref_slice %arg5[%11, %c0_i32_10] : memref<16x32xf32, #tpu.memory_space<any>> -> memref<1x32xf32, #tpu.memory_space<any>>
      %c0_i32_11 = arith.constant 0 : i32
      %c0_i32_12 = arith.constant 0 : i32
      %13 = tpu.memref_slice %arg19[%c0_i32_11, %c0_i32_12] : memref<2x32xf32, #tpu.memory_space<vmem>> -> memref<1x32xf32, #tpu.memory_space<vmem>>
      %14 = tpu.memref_slice %arg20[%c0_i32_9] : memref<2x!tpu.dma_semaphore, #tpu.memory_space<semaphore_mem>> -> memref<1x!tpu.dma_semaphore, #tpu.memory_space<semaphore_mem>>
      %15 = tpu.memref_squeeze %14 : memref<1x!tpu.dma_semaphore, #tpu.memory_space<semaphore_mem>> -> memref<!tpu.dma_semaphore, #tpu.memory_space<semaphore_mem>>
      tpu.enqueue_dma source(%12 : memref<1x32xf32, #tpu.memory_space<any>>) target(%13 : memref<1x32xf32, #tpu.memory_space<vmem>>) target_semaphore(%15 : memref<!tpu.dma_semaphore, #tpu.memory_space<semaphore_mem>>)
      %c1 = arith.constant 1 : index
      %16 = memref.load %arg1[%c1] : memref<2xi32, #tpu.memory_space<smem>>
      %c1_i32 = arith.constant 1 : i32
      %c0_i32_13 = arith.constant 0 : i32
      %17 = tpu.memref_slice %arg5[%16, %c0_i32_13] : memref<16x32xf32, #tpu.memory_space<any>> -> memref<1x32xf32, #tpu.memory_space<any>>
      %c1_i32_14 = arith.constant 1 : i32
      %c0_i32_15 = arith.constant 0 : i32
      %18 = tpu.memref_slice %arg19[%c1_i32_14, %c0_i32_15] : memref<2x32xf32, #tpu.memory_space<vmem>> -> memref<1x32xf32, #tpu.memory_space<vmem>>
      %19 = tpu.memref_slice %arg20[%c1_i32] : memref<2x!tpu.dma_semaphore, #tpu.memory_space<semaphore_mem>> -> memref<1x!tpu.dma_semaphore, #tpu.memory_space<semaphore_mem>>
      %20 = tpu.memref_squeeze %19 : memref<1x!tpu.dma_semaphore, #tpu.memory_space<semaphore_mem>> -> memref<!tpu.dma_semaphore, #tpu.memory_space<semaphore_mem>>
      tpu.enqueue_dma source(%17 : memref<1x32xf32, #tpu.memory_space<any>>) target(%18 : memref<1x32xf32, #tpu.memory_space<vmem>>) target_semaphore(%20 : memref<!tpu.dma_semaphore, #tpu.memory_space<semaphore_mem>>)
      %c0_16 = arith.constant 0 : index
      %c0_17 = arith.constant 0 : index
      %21 = vector.load %arg2[%c0_16, %c0_17] : memref<2x32xf32, #tpu.memory_space<vmem>>, vector<2x32xf32>
      %c0_18 = arith.constant 0 : index
      %c0_19 = arith.constant 0 : index
      %c0_20 = arith.constant 0 : index
      %22 = vector.load %arg4[%c0_18, %c0_19, %c0_20] : memref<2x8x32xf32, #tpu.memory_space<vmem>>, vector<2x8x32xf32>
      %23 = arith.truncf %21 : vector<2x32xf32> to vector<2x32xbf16>
      %24 = vector.shape_cast %22 : vector<2x8x32xf32> to vector<16x32xf32>
      %25 = arith.truncf %24 : vector<16x32xf32> to vector<16x32xbf16>
      %c0_21 = arith.constant 0 : index
      %c0_22 = arith.constant 0 : index
      %26 = vector.load %arg7[%c0_21, %c0_22] : memref<32x32xbf16, #tpu.memory_space<vmem>>, vector<32x32xbf16>
      %cst_23 = arith.constant dense<0.000000e+00> : vector<16x32xf32>
      %27 = tpu.matmul %25, %26, %cst_23 {dimension_numbers = #tpu.dot_dimension_numbers<[1], [0], [0], [1], [0, 0, 1, 1], [], []>} : vector<16x32xbf16>, vector<32x32xbf16>, vector<16x32xf32> -> vector<16x32xf32>
      %28 = vector.shape_cast %27 : vector<16x32xf32> to vector<2x8x32xf32>
      %c0_24 = arith.constant 0 : index
      %c0_25 = arith.constant 0 : index
      %29 = vector.load %arg6[%c0_24, %c0_25] : memref<32x32xbf16, #tpu.memory_space<vmem>>, vector<32x32xbf16>
      %cst_26 = arith.constant dense<0.000000e+00> : vector<2x32xf32>
      %30 = tpu.matmul %23, %29, %cst_26 {dimension_numbers = #tpu.dot_dimension_numbers<[1], [0], [0], [1], [0, 0, 1, 1], [], []>} : vector<2x32xbf16>, vector<32x32xbf16>, vector<2x32xf32> -> vector<2x32xf32>
      %c0_27 = arith.constant 0 : index
      %c0_28 = arith.constant 0 : index
      %31 = vector.load %arg8[%c0_27, %c0_28] : memref<1x32xf32, #tpu.memory_space<vmem>>, vector<1x32xf32>
      %32 = vector.broadcast %31 : vector<1x32xf32> to vector<2x32xf32>
      %33 = arith.addf %30, %32 : vector<2x32xf32>
      %34 = vector.shape_cast %33 : vector<2x32xf32> to vector<2x1x32xf32>
      %35 = vector.broadcast %34 : vector<2x1x32xf32> to vector<2x8x32xf32>
      %36 = arith.addf %28, %35 : vector<2x8x32xf32>
      %cst_29 = arith.constant 0.000000e+00 : f32
      %37 = vector.broadcast %cst_29 : f32 to vector<2x8x32xf32>
      %38 = arith.maximumf %36, %37 : vector<2x8x32xf32>
      %39 = vector.shape_cast %38 : vector<2x8x32xf32> to vector<16x32xf32>
      %40 = arith.truncf %39 : vector<16x32xf32> to vector<16x32xbf16>
      %c0_30 = arith.constant 0 : index
      %c0_31 = arith.constant 0 : index
      %41 = vector.load %arg9[%c0_30, %c0_31] : memref<32x1xbf16, #tpu.memory_space<vmem>>, vector<32x1xbf16>
      %cst_32 = arith.constant dense<0.000000e+00> : vector<16x1xf32>
      %42 = tpu.matmul %40, %41, %cst_32 {dimension_numbers = #tpu.dot_dimension_numbers<[1], [0], [0], [1], [0, 0, 1, 1], [], []>} : vector<16x32xbf16>, vector<32x1xbf16>, vector<16x1xf32> -> vector<16x1xf32>
      %43 = vector.shape_cast %42 : vector<16x1xf32> to vector<2x8x1xf32>
      %c0_33 = arith.constant 0 : index
      %c0_34 = arith.constant 0 : index
      %44 = memref.load %arg10[%c0_33, %c0_34] : memref<1x1xf32, #tpu.memory_space<smem>>
      %45 = vector.broadcast %44 : f32 to vector<2x8x1xf32>
      %46 = arith.addf %43, %45 : vector<2x8x1xf32>
      %cst_35 = arith.constant dense<0xFF800000> : vector<2x1xf32>
      %47 = vector.multi_reduction <maximumf>, %46, %cst_35 [1] : vector<2x8x1xf32> to vector<2x1xf32>
      %48 = vector.shape_cast %47 : vector<2x1xf32> to vector<2x1x1xf32>
      %49 = vector.broadcast %48 : vector<2x1x1xf32> to vector<2x8x1xf32>
      %50 = arith.subf %46, %49 : vector<2x8x1xf32>
      %51 = math.exp %50 : vector<2x8x1xf32>
      %cst_36 = arith.constant dense<0.000000e+00> : vector<2x1xf32>
      %52 = vector.multi_reduction <add>, %51, %cst_36 [1] : vector<2x8x1xf32> to vector<2x1xf32>
      %53 = vector.shape_cast %52 : vector<2x1xf32> to vector<2x1x1xf32>
      %54 = vector.broadcast %53 : vector<2x1x1xf32> to vector<2x8x1xf32>
      %55 = arith.divf %51, %54 : vector<2x8x1xf32>
      %c0_37 = arith.constant 0 : index
      %c0_38 = arith.constant 0 : index
      %c0_39 = arith.constant 0 : index
      %56 = vector.load %arg18[%c0_37, %c0_38, %c0_39] : memref<2x8x1xf32, #tpu.memory_space<vmem>>, vector<2x8x1xf32>
      tpu.vector_store %arg18[%c0_37, %c0_38, %c0_39], %55 {strides = array<i32>} : memref<2x8x1xf32, #tpu.memory_space<vmem>>, vector<2x8x1xf32>,
      "tpu.trace_start"() <{level = 10 : i32, message = "bso,bsh->boh"}> : () -> ()
      %cst_40 = arith.constant dense<0.000000e+00> : vector<2x1x32xf32>
      %57 = tpu.matmul %55, %22, %cst_40 {dimension_numbers = #tpu.dot_dimension_numbers<[1], [1], [2], [2], [0, 0, 0, 2, 1, 2], [0], [0]>} : vector<2x8x1xf32>, vector<2x8x32xf32>, vector<2x1x32xf32> -> vector<2x1x32xf32>
      "tpu.trace_stop"() : () -> ()
      %58 = vector.shape_cast %57 : vector<2x1x32xf32> to vector<2x32xf32>
      %c0_i32_41 = arith.constant 0 : i32
      %c0_i32_42 = arith.constant 0 : i32
      %59 = tpu.memref_slice %arg5[%11, %c0_i32_42] : memref<16x32xf32, #tpu.memory_space<any>> -> memref<1x32xf32, #tpu.memory_space<any>>
      %c0_i32_43 = arith.constant 0 : i32
      %c0_i32_44 = arith.constant 0 : i32
      %60 = tpu.memref_slice %arg19[%c0_i32_43, %c0_i32_44] : memref<2x32xf32, #tpu.memory_space<vmem>> -> memref<1x32xf32, #tpu.memory_space<vmem>>
      %61 = tpu.memref_slice %arg20[%c0_i32_41] : memref<2x!tpu.dma_semaphore, #tpu.memory_space<semaphore_mem>> -> memref<1x!tpu.dma_semaphore, #tpu.memory_space<semaphore_mem>>
      %62 = tpu.memref_squeeze %61 : memref<1x!tpu.dma_semaphore, #tpu.memory_space<semaphore_mem>> -> memref<!tpu.dma_semaphore, #tpu.memory_space<semaphore_mem>>
      tpu.wait_dma2 semaphore(%62 : memref<!tpu.dma_semaphore, #tpu.memory_space<semaphore_mem>>) src(%59 : memref<1x32xf32, #tpu.memory_space<any>>) dst(%60 : memref<1x32xf32, #tpu.memory_space<vmem>>)
      %c1_i32_45 = arith.constant 1 : i32
      %c0_i32_46 = arith.constant 0 : i32
      %63 = tpu.memref_slice %arg5[%16, %c0_i32_46] : memref<16x32xf32, #tpu.memory_space<any>> -> memref<1x32xf32, #tpu.memory_space<any>>
      %c1_i32_47 = arith.constant 1 : i32
      %c0_i32_48 = arith.constant 0 : i32
      %64 = tpu.memref_slice %arg19[%c1_i32_47, %c0_i32_48] : memref<2x32xf32, #tpu.memory_space<vmem>> -> memref<1x32xf32, #tpu.memory_space<vmem>>
      %65 = tpu.memref_slice %arg20[%c1_i32_45] : memref<2x!tpu.dma_semaphore, #tpu.memory_space<semaphore_mem>> -> memref<1x!tpu.dma_semaphore, #tpu.memory_space<semaphore_mem>>
      %66 = tpu.memref_squeeze %65 : memref<1x!tpu.dma_semaphore, #tpu.memory_space<semaphore_mem>> -> memref<!tpu.dma_semaphore, #tpu.memory_space<semaphore_mem>>
      tpu.wait_dma2 semaphore(%66 : memref<!tpu.dma_semaphore, #tpu.memory_space<semaphore_mem>>) src(%63 : memref<1x32xf32, #tpu.memory_space<any>>) dst(%64 : memref<1x32xf32, #tpu.memory_space<vmem>>)
      %c0_49 = arith.constant 0 : index
      %c0_50 = arith.constant 0 : index
      %67 = vector.load %arg19[%c0_49, %c0_50] : memref<2x32xf32, #tpu.memory_space<vmem>>, vector<2x32xf32>
      %68 = tpu.concatenate %67, %58, %21 in 1 : vector<2x32xf32>, vector<2x32xf32>, vector<2x32xf32> -> vector<2x96xf32>
      %69 = arith.truncf %68 : vector<2x96xf32> to vector<2x96xbf16>
      %c0_51 = arith.constant 0 : index
      %c0_52 = arith.constant 0 : index
      %70 = vector.load %arg11[%c0_51, %c0_52] : memref<96x128xbf16, #tpu.memory_space<vmem>>, vector<96x128xbf16>
      %cst_53 = arith.constant dense<0.000000e+00> : vector<2x128xf32>
      %71 = tpu.matmul %69, %70, %cst_53 {dimension_numbers = #tpu.dot_dimension_numbers<[1], [0], [0], [1], [0, 0, 1, 1], [], []>} : vector<2x96xbf16>, vector<96x128xbf16>, vector<2x128xf32> -> vector<2x128xf32>
      %c0_54 = arith.constant 0 : index
      %c0_55 = arith.constant 0 : index
      %72 = vector.load %arg12[%c0_54, %c0_55] : memref<1x128xf32, #tpu.memory_space<vmem>>, vector<1x128xf32>
      %73 = vector.broadcast %72 : vector<1x128xf32> to vector<2x128xf32>
      %74 = arith.addf %71, %73 : vector<2x128xf32>
      %75 = vector.extract_strided_slice %74 {offsets = [0, 0], sizes = [2, 32], strides = [1, 1]} : vector<2x128xf32> to vector<2x32xf32>
      %76 = arith.negf %75 : vector<2x32xf32>
      %77 = math.exp %76 : vector<2x32xf32>
      %cst_56 = arith.constant 1.000000e+00 : f32
      %78 = vector.broadcast %cst_56 : f32 to vector<2x32xf32>
      %79 = arith.addf %78, %77 : vector<2x32xf32>
      %80 = arith.divf %78, %79 : vector<2x32xf32>
      %81 = vector.extract_strided_slice %74 {offsets = [0, 32], sizes = [2, 32], strides = [1, 1]} : vector<2x128xf32> to vector<2x32xf32>
      %82 = arith.negf %81 : vector<2x32xf32>
      %83 = math.exp %82 : vector<2x32xf32>
      %cst_57 = arith.constant 1.000000e+00 : f32
      %84 = vector.broadcast %cst_57 : f32 to vector<2x32xf32>
      %85 = arith.addf %84, %83 : vector<2x32xf32>
      %86 = arith.divf %84, %85 : vector<2x32xf32>
      %87 = vector.extract_strided_slice %74 {offsets = [0, 64], sizes = [2, 32], strides = [1, 1]} : vector<2x128xf32> to vector<2x32xf32>
      %88 = math.tanh %87 : vector<2x32xf32>
      %89 = vector.extract_strided_slice %74 {offsets = [0, 96], sizes = [2, 32], strides = [1, 1]} : vector<2x128xf32> to vector<2x32xf32>
      %90 = arith.negf %89 : vector<2x32xf32>
      %91 = math.exp %90 : vector<2x32xf32>
      %cst_58 = arith.constant 1.000000e+00 : f32
      %92 = vector.broadcast %cst_58 : f32 to vector<2x32xf32>
      %93 = arith.addf %92, %91 : vector<2x32xf32>
      %94 = arith.divf %92, %93 : vector<2x32xf32>
      %c0_59 = arith.constant 0 : index
      %c0_60 = arith.constant 0 : index
      %95 = vector.load %arg3[%c0_59, %c0_60] : memref<2x32xf32, #tpu.memory_space<vmem>>, vector<2x32xf32>
      %96 = arith.mulf %86, %95 : vector<2x32xf32>
      %97 = arith.mulf %80, %88 : vector<2x32xf32>
      %98 = arith.addf %96, %97 : vector<2x32xf32>
      %99 = math.tanh %98 : vector<2x32xf32>
      %100 = arith.mulf %94, %99 : vector<2x32xf32>
      %c0_61 = arith.constant 0 : index
      %c0_62 = arith.constant 0 : index
      %101 = vector.load %arg17[%c0_61, %c0_62] : memref<2x32xf32, #tpu.memory_space<vmem>>, vector<2x32xf32>
      tpu.vector_store %arg17[%c0_61, %c0_62], %98 {strides = array<i32>} : memref<2x32xf32, #tpu.memory_space<vmem>>, vector<2x32xf32>,
      %c0_63 = arith.constant 0 : index
      %c0_64 = arith.constant 0 : index
      %102 = vector.load %arg16[%c0_63, %c0_64] : memref<2x32xf32, #tpu.memory_space<vmem>>, vector<2x32xf32>
      tpu.vector_store %arg16[%c0_63, %c0_64], %100 {strides = array<i32>} : memref<2x32xf32, #tpu.memory_space<vmem>>, vector<2x32xf32>,
    } else {
    }
    %c0 = arith.constant 0 : index
    %c0_1 = arith.constant 0 : index
    %3 = vector.load %arg16[%c0, %c0_1] : memref<2x32xf32, #tpu.memory_space<vmem>>, vector<2x32xf32>
    %4 = arith.truncf %3 : vector<2x32xf32> to vector<2x32xbf16>
    %c0_2 = arith.constant 0 : index
    %c0_3 = arith.constant 0 : index
    %5 = vector.load %arg13[%c0_2, %c0_3] : memref<32x16xbf16, #tpu.memory_space<vmem>>, vector<32x16xbf16>
    %cst = arith.constant dense<0.000000e+00> : vector<2x16xf32>
    %6 = tpu.matmul %4, %5, %cst {dimension_numbers = #tpu.dot_dimension_numbers<[1], [0], [0], [1], [0, 0, 1, 1], [], []>} : vector<2x32xbf16>, vector<32x16xbf16>, vector<2x16xf32> -> vector<2x16xf32>
    %c0_4 = arith.constant 0 : index
    %c0_5 = arith.constant 0 : index
    %7 = vector.load %arg14[%c0_4, %c0_5] : memref<1x16xf32, #tpu.memory_space<vmem>>, vector<1x16xf32>
    %8 = vector.broadcast %7 : vector<1x16xf32> to vector<2x16xf32>
    %9 = arith.addf %6, %8 : vector<2x16xf32>
    %c0_6 = arith.constant 0 : index
    %c0_7 = arith.constant 0 : index
    %10 = vector.load %arg15[%c0_6, %c0_7] : memref<2x16xf32, #tpu.memory_space<vmem>>, vector<2x16xf32>
    tpu.vector_store %arg15[%c0_6, %c0_7], %9 {strides = array<i32>} : memref<2x16xf32, #tpu.memory_space<vmem>>, vector<2x16xf32>,
    return
  }
  func.func @transform_0(%arg0: i32, %arg1: memref<2xi32, #tpu.memory_space<smem>>) -> (i32, i32) {
    %c0_i32 = arith.constant 0 : i32
    %c0_i32_0 = arith.constant 0 : i32
    %c0_i32_1 = arith.constant 0 : i32
    return %c0_i32, %c0_i32_0 : i32, i32
  }
  func.func @transform_1(%arg0: i32, %arg1: memref<2xi32, #tpu.memory_space<smem>>) -> (i32, i32) {
    %c0_i32 = arith.constant 0 : i32
    %c0_i32_0 = arith.constant 0 : i32
    %c0_i32_1 = arith.constant 0 : i32
    return %c0_i32, %c0_i32_0 : i32, i32
  }
  func.func @transform_2(%arg0: i32, %arg1: memref<2xi32, #tpu.memory_space<smem>>) -> (i32, i32, i32) {
    %c0_i32 = arith.constant 0 : i32
    %c0_i32_0 = arith.constant 0 : i32
    %c0_i32_1 = arith.constant 0 : i32
    %c0_i32_2 = arith.constant 0 : i32
    return %c0_i32, %c0_i32_0, %c0_i32_1 : i32, i32, i32
  }
  func.func @transform_4(%arg0: i32, %arg1: memref<2xi32, #tpu.memory_space<smem>>) -> (i32, i32) {
    %c0_i32 = arith.constant 0 : i32
    %c0_i32_0 = arith.constant 0 : i32
    %c0_i32_1 = arith.constant 0 : i32
    return %c0_i32, %c0_i32_0 : i32, i32
  }
  func.func @transform_5(%arg0: i32, %arg1: memref<2xi32, #tpu.memory_space<smem>>) -> (i32, i32) {
    %c0_i32 = arith.constant 0 : i32
    %c0_i32_0 = arith.constant 0 : i32
    %c0_i32_1 = arith.constant 0 : i32
    return %c0_i32, %c0_i32_0 : i32, i32
  }
  func.func @transform_6(%arg0: i32, %arg1: memref<2xi32, #tpu.memory_space<smem>>) -> (i32, i32) {
    %c0_i32 = arith.constant 0 : i32
    %c0_i32_0 = arith.constant 0 : i32
    %c0_i32_1 = arith.constant 0 : i32
    return %c0_i32, %c0_i32_0 : i32, i32
  }
  func.func @transform_7(%arg0: i32, %arg1: memref<2xi32, #tpu.memory_space<smem>>) -> (i32, i32) {
    %c0_i32 = arith.constant 0 : i32
    %c0_i32_0 = arith.constant 0 : i32
    %c0_i32_1 = arith.constant 0 : i32
    return %c0_i32, %c0_i32_0 : i32, i32
  }
  func.func @transform_8(%arg0: i32, %arg1: memref<2xi32, #tpu.memory_space<smem>>) -> (i32, i32) {
    %c0_i32 = arith.constant 0 : i32
    %c0_i32_0 = arith.constant 0 : i32
    %c0_i32_1 = arith.constant 0 : i32
    return %c0_i32, %c0_i32_0 : i32, i32
  }
  func.func @transform_9(%arg0: i32, %arg1: memref<2xi32, #tpu.memory_space<smem>>) -> (i32, i32) {
    %c0_i32 = arith.constant 0 : i32
    %c0_i32_0 = arith.constant 0 : i32
    %c0_i32_1 = arith.constant 0 : i32
    return %c0_i32, %c0_i32_0 : i32, i32
  }
  func.func @transform_10(%arg0: i32, %arg1: memref<2xi32, #tpu.memory_space<smem>>) -> (i32, i32) {
    %c0_i32 = arith.constant 0 : i32
    %c0_i32_0 = arith.constant 0 : i32
    %c0_i32_1 = arith.constant 0 : i32
    return %c0_i32, %c0_i32_0 : i32, i32
  }
  func.func @transform_11(%arg0: i32, %arg1: memref<2xi32, #tpu.memory_space<smem>>) -> (i32, i32) {
    %c0_i32 = arith.constant 0 : i32
    %c0_i32_0 = arith.constant 0 : i32
    return %c0_i32, %arg0 : i32, i32
  }
  func.func @transform_12(%arg0: i32, %arg1: memref<2xi32, #tpu.memory_space<smem>>) -> (i32, i32) {
    %c0_i32 = arith.constant 0 : i32
    %c0_i32_0 = arith.constant 0 : i32
    return %c0_i32, %arg0 : i32, i32
  }
  func.func @transform_13(%arg0: i32, %arg1: memref<2xi32, #tpu.memory_space<smem>>) -> (i32, i32) {
    %c0_i32 = arith.constant 0 : i32
    %c0_i32_0 = arith.constant 0 : i32
    return %c0_i32, %arg0 : i32, i32
  }
  func.func @transform_14(%arg0: i32, %arg1: memref<2xi32, #tpu.memory_space<smem>>) -> (i32, i32) {
    %c0_i32 = arith.constant 0 : i32
    %c0_i32_0 = arith.constant 0 : i32
    %c0_i32_1 = arith.constant 0 : i32
    return %c0_i32, %c0_i32_0 : i32, i32
  }
  func.func @transform_15(%arg0: i32, %arg1: memref<2xi32, #tpu.memory_space<smem>>) -> (i32, i32) {
    %c0_i32 = arith.constant 0 : i32
    %c0_i32_0 = arith.constant 0 : i32
    %c0_i32_1 = arith.constant 0 : i32
    return %c0_i32, %c0_i32_0 : i32, i32
  }
  func.func @transform_16(%arg0: i32, %arg1: memref<2xi32, #tpu.memory_space<smem>>) -> (i32, i32, i32) {
    %c0_i32 = arith.constant 0 : i32
    %c0_i32_0 = arith.constant 0 : i32
    %c0_i32_1 = arith.constant 0 : i32
    %c0_i32_2 = arith.constant 0 : i32
    return %c0_i32, %c0_i32_0, %c0_i32_1 : i32, i32, i32
  }
}

</mosaic_0001>

<llo_original>
// kernel: tpu_custom_call.1
$region0: #{tpu_custom_call.1}
  #allocation0 [shape = 'u32[]', space=smem, size = 0x4, offset = 0x4, fixed_abs, tag = 'smem constant byte address 0x4 - core index']
  #allocation1 [shape = 'u32[72,128]{1,0:T(1,128)}', space=vmem, size = 0x9000, scoped, tag = 'internal scratch']
  #allocation2 [shape = 'f32[2,32]{1,0:T(2,128)}', space=vmem, size = 0x400, scoped, tag = 'scratch operand']
  #allocation3 [shape = 's32[2]{0}', space=sflag, size = 0x8, scoped, tag = 'scratch operand']
  #allocation4 [shape = 's32[1]{0}', space=sflag, size = 0x4, scoped, tag = 'scoped memory for tpu_custom_call.1']
  #allocation5 [shape = 'u8[512]{0}', space=smem, size = 0x200, scoped, tag = 'prefetched SMEM operand 0']
  #allocation6 [shape = 'f32[1,1]{1,0:T(1,128)S(6)}', space=smem, size = 0x200, scoped, tag = 'scoped memory for tpu_custom_call.1']
  #allocation19 [shape = 's32[]', space=sflag, size = 0x4, offset = 0, fixed_abs, tag = 'sflag constant byte address 0x0 - dummy sync flag']
  #allocation20 [shape = 's32[]', space=sflag, size = 0x4, offset = 0, fixed_abs, tag = 'sflag constant byte address 0x0 - dummy sync flag']
  %s0 = inlined_call_operand.hbm [shape: s32[2], index: 0, kind: input, shape index: {}]
  %s1 = inlined_call_operand.vmem [shape: f32[2,32], index: 1, kind: input, shape index: {}]
  %s2 = inlined_call_operand.hbm [shape: f32[2,32], index: 2, kind: input, shape index: {}]
  %s3 = inlined_call_operand.vmem [shape: f32[2,8,32], index: 3, kind: input, shape index: {}]
  %s4 = inlined_call_operand.vmem [shape: f32[16,32], index: 4, kind: input, shape index: {}]
  %s5 = inlined_call_operand.hbm [shape: bf16[32,32], index: 5, kind: input, shape index: {}]
  %s6 = inlined_call_operand.hbm [shape: bf16[32,32], index: 6, kind: input, shape index: {}]
  %s7 = inlined_call_operand.vmem [shape: f32[1,32], index: 7, kind: input, shape index: {}]
  %s8 = inlined_call_operand.vmem [shape: bf16[32,1], index: 8, kind: input, shape index: {}]
  %s9 = inlined_call_operand.<no memory space> [shape: f32[1,1], index: 9, kind: input, shape index: {}]
  %s10 = inlined_call_operand.hbm [shape: bf16[96,128], index: 10, kind: input, shape index: {}]
  %s11 = inlined_call_operand.vmem [shape: f32[1,128], index: 11, kind: input, shape index: {}]
  %s12 = inlined_call_operand.vmem [shape: bf16[32,16], index: 12, kind: input, shape index: {}]
  %s13 = inlined_call_operand.vmem [shape: f32[1,16], index: 13, kind: input, shape index: {}]
  %s14 = inlined_call_operand.hbm [shape: f32[2,16], index: 14, kind: output, shape index: {0}]
  %s15 = inlined_call_operand.hbm [shape: f32[2,32], index: 15, kind: output, shape index: {1}]
  %s16 = inlined_call_operand.hbm [shape: f32[2,32], index: 16, kind: output, shape index: {2}]
  %s17 = inlined_call_operand.vmem [shape: f32[2,8,1], index: 17, kind: output, shape index: {3}]
  %18 = xla_tuple %s14, %s15, %s16, %s17
  %s19 = sld [smem:[#allocation0]]
  $region162: #{tpu_custom_call.1} parent=0
    _
  %s21 = ssub.s32 1, %s19
  %s22 = scalar_select 0, %s21, %s19
  %s24 = sshll.u32 %s0, 4
  %s25 = int_to_ptr.hbm [resolvable:$true] %s24
  %27 = dma.hbm_to_smem %s25, 16, [#allocation5], [#allocation4]
  %28 = sst [smem:[#allocation6]] %s9
  %30 = dma.done [#allocation4], 16
  %31 = sfence
  $region1: #{tpu_custom_call.1} parent=0
    #allocation7 [shape = 'u8[1024]{0}', space=vmem, size = 0x400, scoped, tag = 'input window, operand 2, single buffered']
    #allocation8 [shape = 's32[1]{0}', space=sflag, size = 0x4, scoped, tag = 'scoped memory for tpu_custom_call.1']
    #allocation9 [shape = 's32[1]{0}', space=sflag, size = 0x4, scoped, tag = 'scoped memory for tpu_custom_call.1']
    #allocation10 [shape = 'u8[8192]{0}', space=vmem, size = 0x2000, scoped, tag = 'input window, operand 5, single buffered']
    #allocation11 [shape = 's32[1]{0}', space=sflag, size = 0x4, scoped, tag = 'scoped memory for tpu_custom_call.1']
    #allocation12 [shape = 'u8[8192]{0}', space=vmem, size = 0x2000, scoped, tag = 'input window, operand 6, single buffered']
    #allocation13 [shape = 'u8[24576]{0}', space=vmem, size = 0x6000, scoped, tag = 'input window, operand 10, single buffered']
    #allocation14 [shape = 's32[1]{0}', space=sflag, size = 0x4, scoped, tag = 'scoped memory for tpu_custom_call.1']
    #allocation15 [shape = 'u8[1024]{0}', space=vmem, size = 0x400, scoped, tag = 'output window, operand 0, single buffered']
    #allocation16 [shape = 'u8[1024]{0}', space=vmem, size = 0x400, scoped, tag = 'output window, operand 1, single buffered']
    #allocation17 [shape = 's32[1]{0}', space=sflag, size = 0x4, scoped, tag = 'scoped memory for tpu_custom_call.1']
    #allocation18 [shape = 'u8[1024]{0}', space=vmem, size = 0x400, scoped, tag = 'output window, operand 2, single buffered']
    %32 = vsyncpa [#allocation8], 0
    %33 = vsyncpa [#allocation11], 0
    %34 = vsyncpa [#allocation14], 0
    %35 = vsyncpa [#allocation9], 0
    %36 = vsyncpa [#allocation17], 0
    // Predicated region
    $region2: #{tpu_custom_call.1} parent=1 // pred_check
      _
    $region3: #{tpu_custom_call.1} parent=1 // pred_check_branch
      %38 = sbr.rel (0) target = $region5
    $region4: #{tpu_custom_call.1} parent=1 // pred_region
      _
    $region5: #{tpu_custom_call.1} parent=1 // pred_fallthru
      _
    // Predicated region
    $region6: #{tpu_custom_call.1} parent=1 // pred_check
      _
    $region7: #{tpu_custom_call.1} parent=1 // pred_check_branch
      %40 = sbr.rel (0) target = $region9
    $region8: #{tpu_custom_call.1} parent=1 // pred_region
      %42 = vsyncadd [#allocation8], 0
      %s44 = sshll.u32 %s2, 4
      %s45 = int_to_ptr.hbm [resolvable:$true] %s44
      %s46 = sshll.u32 [#allocation7], 4
      %s47 = int_to_ptr.vmem [resolvable:$true] %s46
      %49 = dma.hbm_to_vmem [thread:$0]  %s45, 32, %s47, [#allocation8]
    $region9: #{tpu_custom_call.1} parent=1 // pred_fallthru
      _
    // Predicated region
    $region10: #{tpu_custom_call.1} parent=1 // pred_check
      _
    $region11: #{tpu_custom_call.1} parent=1 // pred_check_branch
      %51 = sbr.rel (0) target = $region13
    $region12: #{tpu_custom_call.1} parent=1 // pred_region
      _
    $region13: #{tpu_custom_call.1} parent=1 // pred_fallthru
      _
    // Predicated region
    $region14: #{tpu_custom_call.1} parent=1 // pred_check
      _
    $region15: #{tpu_custom_call.1} parent=1 // pred_check_branch
      %53 = sbr.rel (0) target = $region17
    $region16: #{tpu_custom_call.1} parent=1 // pred_region
      %55 = vsyncadd [#allocation11], 0
      %s56 = sshll.u32 %s5, 4
      %s57 = int_to_ptr.hbm [resolvable:$true] %s56
      %s58 = sshll.u32 [#allocation10], 4
      %s59 = int_to_ptr.vmem [resolvable:$true] %s58
      %64 = dma.hbm_to_vmem [thread:$0]  %s57, 256, %s59, [#allocation11], 64, 64, 4
    $region17: #{tpu_custom_call.1} parent=1 // pred_fallthru
      _
    // Predicated region
    $region18: #{tpu_custom_call.1} parent=1 // pred_check
      _
    $region19: #{tpu_custom_call.1} parent=1 // pred_check_branch
      %66 = sbr.rel (0) target = $region21
    $region20: #{tpu_custom_call.1} parent=1 // pred_region
      %68 = vsyncadd [#allocation11], 0
      %s69 = sshll.u32 %s6, 4
      %s70 = int_to_ptr.hbm [resolvable:$true] %s69
      %s71 = sshll.u32 [#allocation12], 4
      %s72 = int_to_ptr.vmem [resolvable:$true] %s71
      %77 = dma.hbm_to_vmem [thread:$0]  %s70, 256, %s72, [#allocation11], 64, 64, 4
    $region21: #{tpu_custom_call.1} parent=1 // pred_fallthru
      _
    // Predicated region
    $region22: #{tpu_custom_call.1} parent=1 // pred_check
      _
    $region23: #{tpu_custom_call.1} parent=1 // pred_check_branch
      %79 = sbr.rel (0) target = $region25
    $region24: #{tpu_custom_call.1} parent=1 // pred_region
      _
    $region25: #{tpu_custom_call.1} parent=1 // pred_fallthru
      _
    // Predicated region
    $region26: #{tpu_custom_call.1} parent=1 // pred_check
      _
    $region27: #{tpu_custom_call.1} parent=1 // pred_check_branch
      %81 = sbr.rel (0) target = $region29
    $region28: #{tpu_custom_call.1} parent=1 // pred_region
      _
    $region29: #{tpu_custom_call.1} parent=1 // pred_fallthru
      _
    // Predicated region
    $region30: #{tpu_custom_call.1} parent=1 // pred_check
      _
    $region31: #{tpu_custom_call.1} parent=1 // pred_check_branch
      %83 = sbr.rel (0) target = $region33
    $region32: #{tpu_custom_call.1} parent=1 // pred_region
      _
    $region33: #{tpu_custom_call.1} parent=1 // pred_fallthru
      _
    // Predicated region
    $region34: #{tpu_custom_call.1} parent=1 // pred_check
      _
    $region35: #{tpu_custom_call.1} parent=1 // pred_check_branch
      %85 = sbr.rel (0) target = $region37
    $region36: #{tpu_custom_call.1} parent=1 // pred_region
      %87 = vsyncadd [#allocation14], 0
      %s88 = sshll.u32 %s10, 4
      %s89 = int_to_ptr.hbm [resolvable:$true] %s88
      %s90 = sshll.u32 [#allocation13], 4
      %s91 = int_to_ptr.vmem [resolvable:$true] %s90
      %96 = dma.hbm_to_vmem [thread:$0]  %s89, 768, %s91, [#allocation14], 64, 64, 4
    $region37: #{tpu_custom_call.1} parent=1 // pred_fallthru
      _
    // Predicated region
    $region38: #{tpu_custom_call.1} parent=1 // pred_check
      _
    $region39: #{tpu_custom_call.1} parent=1 // pred_check_branch
      %98 = sbr.rel (0) target = $region41
    $region40: #{tpu_custom_call.1} parent=1 // pred_region
      _
    $region41: #{tpu_custom_call.1} parent=1 // pred_fallthru
      _
    // Predicated region
    $region42: #{tpu_custom_call.1} parent=1 // pred_check
      _
    $region43: #{tpu_custom_call.1} parent=1 // pred_check_branch
      %100 = sbr.rel (0) target = $region45
    $region44: #{tpu_custom_call.1} parent=1 // pred_region
      _
    $region45: #{tpu_custom_call.1} parent=1 // pred_fallthru
      _
    // Predicated region
    $region46: #{tpu_custom_call.1} parent=1 // pred_check
      _
    $region47: #{tpu_custom_call.1} parent=1 // pred_check_branch
      %102 = sbr.rel (0) target = $region49
    $region48: #{tpu_custom_call.1} parent=1 // pred_region
      _
    $region49: #{tpu_custom_call.1} parent=1 // pred_fallthru
      _
    // Predicated region
    $region50: #{tpu_custom_call.1} parent=1 // pred_check
      _
    $region51: #{tpu_custom_call.1} parent=1 // pred_check_branch
      %104 = sbr.rel (0) target = $region53
    $region52: #{tpu_custom_call.1} parent=1 // pred_region
      %106 = dma.done [#allocation8], 32
    $region53: #{tpu_custom_call.1} parent=1 // pred_fallthru
      _
    // Predicated region
    $region54: #{tpu_custom_call.1} parent=1 // pred_check
      _
    $region55: #{tpu_custom_call.1} parent=1 // pred_check_branch
      %108 = sbr.rel (0) target = $region57
    $region56: #{tpu_custom_call.1} parent=1 // pred_region
      %110 = dma.done [#allocation11], 256
    $region57: #{tpu_custom_call.1} parent=1 // pred_fallthru
      _
    // Predicated region
    $region58: #{tpu_custom_call.1} parent=1 // pred_check
      _
    $region59: #{tpu_custom_call.1} parent=1 // pred_check_branch
      %112 = sbr.rel (0) target = $region61
    $region60: #{tpu_custom_call.1} parent=1 // pred_region
      %114 = dma.done [#allocation11], 256
    $region61: #{tpu_custom_call.1} parent=1 // pred_fallthru
      _
    // Predicated region
    $region62: #{tpu_custom_call.1} parent=1 // pred_check
      _
    $region63: #{tpu_custom_call.1} parent=1 // pred_check_branch
      %116 = sbr.rel (0) target = $region65
    $region64: #{tpu_custom_call.1} parent=1 // pred_region
      %118 = dma.done [#allocation14], 768
    $region65: #{tpu_custom_call.1} parent=1 // pred_fallthru
      _
    %p120 = scmp.eq.s32.totalorder 0, 0
    // Predicated region
    $region66: #{tpu_custom_call.1} parent=1 // pred_check
      %p121 = pneg %p120
    $region67: #{tpu_custom_call.1} parent=1 // pred_check_branch
      %123 = sbr.rel (%p121) target = $region69
    $region68: #{tpu_custom_call.1} parent=1 // pred_region
      %s124 = sld [smem:[#allocation5]]
      %s125 = scalar_lea.vmem %s4, %s124
      // Predicated region
      $region70: #{tpu_custom_call.1} parent=68 // pred_check
        _
      $region71: #{tpu_custom_call.1} parent=68 // pred_check_branch
        %127 = sbr.rel target = $region73
      $region72: #{tpu_custom_call.1} parent=68 // pred_region
        // Predicated region
        $region85: #{tpu_custom_call.1} parent=72 // pred_check
          _
        $region86: #{tpu_custom_call.1} parent=72 // pred_check_branch
          %143 = sbr.rel (0) target = $region88
        $region87: #{tpu_custom_call.1} parent=72 // pred_region
          %s145 = ssub.s32 2, 1
          loop: start=0, step=1, limit=1
          $region89: #{tpu_custom_call.1} parent=87 // loop_pre_header
            _
          $region90: #{tpu_custom_call.1} parent=87 // loop_header
            %s147 = sphi 0, %s151
            %p148 = scmp.ge.s32.totalorder %s147, 1
            %s152 = sphi %s125, %s125
            %s153 = sphi [#allocation2], [#allocation2]
          $region91: #{tpu_custom_call.1} parent=87 // loop_header_branch
            %150 = sbr.rel (%p148) target = $region95
          $region92: #{tpu_custom_call.1} parent=87 // loop_body
            %v154 = vld [vmem:[%s152] sm:%s145]
            %155 = vst [vmem:[%s153] sm:%s145] %v154
          $region93: #{tpu_custom_call.1} parent=87 // loop_footer
            %s151 = sadd.s32 1, %s147
          $region94: #{tpu_custom_call.1} parent=87 // loop_footer_branch
            %146 = sbr.rel target = $region90
          $region95: #{tpu_custom_call.1} parent=87 // loop_exit
            _
        $region88: #{tpu_custom_call.1} parent=72 // pred_fallthru
          _
      $region73: #{tpu_custom_call.1} parent=68 // pred_fallthru
        _
      // Predicated region
      $region74: #{tpu_custom_call.1} parent=68 // pred_check
        _
      $region75: #{tpu_custom_call.1} parent=68 // pred_check_branch
        %129 = sbr.rel (0) target = $region77
      $region76: #{tpu_custom_call.1} parent=68 // pred_region
        %s131 = ssub.s32 2, 1
        loop: start=0, step=1, limit=1
        $region78: #{tpu_custom_call.1} parent=76 // loop_pre_header
          _
        $region79: #{tpu_custom_call.1} parent=76 // loop_header
          %s133 = sphi 0, %s137
          %p134 = scmp.ge.s32.totalorder %s133, 1
          %s138 = sphi %s125, %s125
          %s139 = sphi [#allocation2], [#allocation2]
        $region80: #{tpu_custom_call.1} parent=76 // loop_header_branch
          %136 = sbr.rel (%p134) target = $region84
        $region81: #{tpu_custom_call.1} parent=76 // loop_body
          %v140 = vld [vmem:[%s138] sm:%s131]
          %141 = vst [vmem:[%s139] sm:%s131] %v140
        $region82: #{tpu_custom_call.1} parent=76 // loop_footer
          %s137 = sadd.s32 1, %s133
        $region83: #{tpu_custom_call.1} parent=76 // loop_footer_branch
          %132 = sbr.rel target = $region79
        $region84: #{tpu_custom_call.1} parent=76 // loop_exit
          _
      $region77: #{tpu_custom_call.1} parent=68 // pred_fallthru
        _
      // Predicated region
      $region96: #{tpu_custom_call.1} parent=68 // pred_check
        _
      $region97: #{tpu_custom_call.1} parent=68 // pred_check_branch
        %158 = sbr.rel (0) target = $region99
      $region98: #{tpu_custom_call.1} parent=68 // pred_region
        %159 = vsyncadd [#allocation3], 16
      $region99: #{tpu_custom_call.1} parent=68 // pred_fallthru
        _
      %s160 = sld [smem:[#allocation5 + $0x1]]
      %s161 = scalar_lea.vmem %s4, %s160
      %s162 = scalar_lea.vmem [#allocation2], 1
      %s163 = scalar_lea.sflag [#allocation3], 1
      // Predicated region
      $region100: #{tpu_custom_call.1} parent=68 // pred_check
        _
      $region101: #{tpu_custom_call.1} parent=68 // pred_check_branch
        %165 = sbr.rel target = $region103
      $region102: #{tpu_custom_call.1} parent=68 // pred_region
        // Predicated region
        $region115: #{tpu_custom_call.1} parent=102 // pred_check
          _
        $region116: #{tpu_custom_call.1} parent=102 // pred_check_branch
          %181 = sbr.rel (0) target = $region118
        $region117: #{tpu_custom_call.1} parent=102 // pred_region
          %s183 = ssub.s32 2, 1
          loop: start=0, step=1, limit=1
          $region119: #{tpu_custom_call.1} parent=117 // loop_pre_header
            _
          $region120: #{tpu_custom_call.1} parent=117 // loop_header
            %s185 = sphi 0, %s189
            %p186 = scmp.ge.s32.totalorder %s185, 1
            %s190 = sphi %s161, %s161
            %s191 = sphi %s162, %s162
          $region121: #{tpu_custom_call.1} parent=117 // loop_header_branch
            %188 = sbr.rel (%p186) target = $region125
          $region122: #{tpu_custom_call.1} parent=117 // loop_body
            %v192 = vld [vmem:[%s190] sm:%s183]
            %193 = vst [vmem:[%s191] sm:%s183] %v192
          $region123: #{tpu_custom_call.1} parent=117 // loop_footer
            %s189 = sadd.s32 1, %s185
          $region124: #{tpu_custom_call.1} parent=117 // loop_footer_branch
            %184 = sbr.rel target = $region120
          $region125: #{tpu_custom_call.1} parent=117 // loop_exit
            _
        $region118: #{tpu_custom_call.1} parent=102 // pred_fallthru
          _
      $region103: #{tpu_custom_call.1} parent=68 // pred_fallthru
        _
      // Predicated region
      $region104: #{tpu_custom_call.1} parent=68 // pred_check
        _
      $region105: #{tpu_custom_call.1} parent=68 // pred_check_branch
        %167 = sbr.rel (0) target = $region107
      $region106: #{tpu_custom_call.1} parent=68 // pred_region
        %s169 = ssub.s32 2, 1
        loop: start=0, step=1, limit=1
        $region108: #{tpu_custom_call.1} parent=106 // loop_pre_header
          _
        $region109: #{tpu_custom_call.1} parent=106 // loop_header
          %s171 = sphi 0, %s175
          %p172 = scmp.ge.s32.totalorder %s171, 1
          %s176 = sphi %s161, %s161
          %s177 = sphi %s162, %s162
        $region110: #{tpu_custom_call.1} parent=106 // loop_header_branch
          %174 = sbr.rel (%p172) target = $region114
        $region111: #{tpu_custom_call.1} parent=106 // loop_body
          %v178 = vld [vmem:[%s176] sm:%s169]
          %179 = vst [vmem:[%s177] sm:%s169] %v178
        $region112: #{tpu_custom_call.1} parent=106 // loop_footer
          %s175 = sadd.s32 1, %s171
        $region113: #{tpu_custom_call.1} parent=106 // loop_footer_branch
          %170 = sbr.rel target = $region109
        $region114: #{tpu_custom_call.1} parent=106 // loop_exit
          _
      $region107: #{tpu_custom_call.1} parent=68 // pred_fallthru
        _
      // Predicated region
      $region126: #{tpu_custom_call.1} parent=68 // pred_check
        _
      $region127: #{tpu_custom_call.1} parent=68 // pred_check_branch
        %196 = sbr.rel (0) target = $region129
      $region128: #{tpu_custom_call.1} parent=68 // pred_region
        %197 = vsyncadd %s163, 16
      $region129: #{tpu_custom_call.1} parent=68 // pred_fallthru
        _
      %v198 = vld [vmem:[%s1] sm:$0x3]
      %v199 = vld [vmem:[%s3] sm:$0xff]
      %v200 = vld [vmem:[%s3 + $0x8] sm:$0xff]
      %v201 = vpack.c.bf16 %v198, %v198
      %v202 = vpack.c.bf16 %v200, %v199
      %v203 = vld [vmem:[#allocation12] sm:$0xf]
      %v204 = vld [vmem:[#allocation12 + $0x4] sm:$0xf]
      %v205 = vld [vmem:[#allocation12 + $0x8] sm:$0xf]
      %v206 = vld [vmem:[#allocation12 + $0xc] sm:$0xf]
      %v211 = vunpack.c.l.b16 %v203
      %v212 = vunpack.c.l.b16 %v204
      %v213 = vunpack.c.l.b16 %v205
      %v214 = vunpack.c.l.b16 %v206
      %v215 = vpack.c.b16 %v212, %v211
      %v216 = vpack.c.b16 %v214, %v213
      %vm219 = vcmask 261120
      %v221 = vsel %vm219, %v202, 0
      %223 = vmatpush.bf16.msra.mxu0 0
      %224 = vmatpush.bf16.msra.mxu0 0
      %225 = vmatpush.bf16.msra.mxu0 0
      %226 = vmatpush.bf16.msra.mxu0 0
      %227 = vmatpush.bf16.msra.mxu0 0
      %228 = vmatpush.bf16.msra.mxu0 0
      %229 = vmatpush.bf16.msra.mxu0 %v216
      %230 = vmatpush.bf16.msra.mxu0 %v215
      %231 = vmatmul.bf16.gmra.mxu0 %v221
      %v232 = vpop.f32.mrf.mxu0
      %v233 = vadd.f32 0.0, %v232
      %v234 = vpop.f32.mrf.mxu0
      %v235 = vadd.f32 0.0, %v234
      %236 = vdwg.mxu0
      %v237 = vld [vmem:[#allocation10] sm:$0xf]
      %v238 = vld [vmem:[#allocation10 + $0x4] sm:$0xf]
      %v239 = vld [vmem:[#allocation10 + $0x8] sm:$0xf]
      %v240 = vld [vmem:[#allocation10 + $0xc] sm:$0xf]
      %v241 = vld [vmem:[%s7] sm:$0x1]
      %v243 = vperm.slane %v241, 0
      %v249 = vunpack.c.l.b16 %v237
      %v250 = vunpack.c.l.b16 %v238
      %v251 = vunpack.c.l.b16 %v239
      %v252 = vunpack.c.l.b16 %v240
      %v253 = vpack.c.b16 %v250, %v249
      %v254 = vpack.c.b16 %v252, %v251
      %v258 = vsel %vm219, %v201, 0
      %260 = vmatpush.bf16.msra.mxu0 0
      %261 = vmatpush.bf16.msra.mxu0 0
      %262 = vmatpush.bf16.msra.mxu0 0
      %263 = vmatpush.bf16.msra.mxu0 0
      %264 = vmatpush.bf16.msra.mxu0 0
      %265 = vmatpush.bf16.msra.mxu0 0
      %266 = vmatpush.bf16.msra.mxu0 %v254
      %267 = vmatpush.bf16.msra.mxu0 %v253
      %268 = vmatmul.bf16.gmra.mxu0 %v258
      %v269 = vpop.f32.mrf.mxu0
      %v270 = vadd.f32 %v243, %v269
      %v271 = vpop.f32.mrf.mxu0
      %272 = vdwg.mxu0
      %v274 = vrot.slane %v270, 1
      %v275 = vperm.slane %v270, 0
      %v276 = vperm.slane %v274, 0
      %v279 = vadd.f32 %v233, %v275
      %v280 = vadd.f32 %v235, %v276
      %v281 = vmax.f32 %v279, 0.0
      %v282 = vmax.f32 %v280, 0.0
      %v283 = vpack.c.bf16 %v282, %v281
      %v284 = vld [vmem:[%s8] sm:$0xf]
      %v285 = vld [vmem:[%s8 + $0x4] sm:$0xf]
      %v286 = vld [vmem:[%s8 + $0x8] sm:$0xf]
      %v287 = vld [vmem:[%s8 + $0xc] sm:$0xf]
      %v292 = vunpack.c.l.b16 %v284
      %v293 = vunpack.c.l.b16 %v285
      %v294 = vunpack.c.l.b16 %v286
      %v295 = vunpack.c.l.b16 %v287
      %v296 = vpack.c.b16 %v293, %v292
      %v297 = vpack.c.b16 %v295, %v294
      %v301 = vsel %vm219, %v283, 0
      %303 = vmatpush.bf16.msra.mxu0 0
      %304 = vmatpush.bf16.msra.mxu0 0
      %305 = vmatpush.bf16.msra.mxu0 0
      %306 = vmatpush.bf16.msra.mxu0 0
      %307 = vmatpush.bf16.msra.mxu0 0
      %308 = vmatpush.bf16.msra.mxu0 0
      %309 = vmatpush.bf16.msra.mxu0 %v297
      %310 = vmatpush.bf16.msra.mxu0 %v296
      %311 = vmatmul.bf16.gmra.mxu0 %v301
      %v312 = vpop.f32.mrf.mxu0
      %v313 = vadd.f32 0.0, %v312
      %v314 = vpop.f32.mrf.mxu0
      %v315 = vadd.f32 0.0, %v314
      %316 = vdwg.mxu0
      %s317 = sld [smem:[#allocation6]]
      %v318 = vstv %s317
      %v319 = vadd.f32 %v313, %v318
      %v320 = vadd.f32 %v315, %v318
      %vm321 = vcmask 7168
      %v322 = vsel %vm321, %v319, -inf
      %v323 = vrot.slane %v322, 4
      %v324 = vmax.f32 %v322, %v323
      %v325 = vrot.slane %v324, 2
      %v326 = vmax.f32 %v324, %v325
      %v327 = vrot.slane %v326, 1
      %v328 = vmax.f32 %v326, %v327
      %v329 = vsel %vm321, %v320, -inf
      %v330 = vrot.slane %v329, 4
      %v331 = vmax.f32 %v329, %v330
      %v332 = vrot.slane %v331, 2
      %v333 = vmax.f32 %v331, %v332
      %v334 = vrot.slane %v333, 1
      %v335 = vmax.f32 %v333, %v334
      %v336 = vsub.f32 %v319, %v328
      %v337 = vsub.f32 %v320, %v335
      %v338 = vmul.f32 %v336, 1.442695
      %v339 = vpow.pop %v338
      %v340 = vmul.f32 %v337, 1.442695
      %v341 = vpow.pop %v340
      %v342 = vsel %vm321, %v339, 0.0
      %v343 = vrot.slane %v342, 4
      %v344 = vadd.f32 %v342, %v343
      %v345 = vrot.slane %v344, 2
      %v346 = vadd.f32 %v344, %v345
      %v347 = vrot.slane %v346, 1
      %v348 = vadd.f32 %v346, %v347
      %v349 = vsel %vm321, %v341, 0.0
      %v350 = vrot.slane %v349, 4
      %v351 = vadd.f32 %v349, %v350
      %v352 = vrot.slane %v351, 2
      %v353 = vadd.f32 %v351, %v352
      %v354 = vrot.slane %v353, 1
      %v355 = vadd.f32 %v353, %v354
      %v356 = vrcp.pop %v348
      %v357 = vmul.f32 %v348, %v356
      %v358 = vsub.f32 1.0, %v357
      %v359 = vmul.f32 %v356, %v358
      %v360 = vadd.f32 %v356, %v359
      %vm361 = vweird.f32 %v348
      %vm362 = vweird.f32 %v356
      %vm363 = vmor %vm361, %vm362
      %v364 = vsel %vm363, %v356, %v360
      %v365 = vand.u32 2147483647, %v348
      %vm366 = vcmp.eq.f32.partialorder %v365, 8.507059e+37
      %v367 = vand.u32 %v348, 2147483648
      %v368 = vor.u32 1.1754944e-38, %v367
      %v369 = vsel %vm366, %v368, %v364
      %v370 = vmul.f32 %v339, %v369
      %v371 = vrcp.pop %v355
      %v372 = vmul.f32 %v355, %v371
      %v373 = vsub.f32 1.0, %v372
      %v374 = vmul.f32 %v371, %v373
      %v375 = vadd.f32 %v371, %v374
      %vm376 = vweird.f32 %v355
      %vm377 = vweird.f32 %v371
      %vm378 = vmor %vm376, %vm377
      %v379 = vsel %vm378, %v371, %v375
      %v380 = vand.u32 2147483647, %v355
      %vm381 = vcmp.eq.f32.partialorder %v380, 8.507059e+37
      %v382 = vand.u32 %v355, 2147483648
      %v383 = vor.u32 1.1754944e-38, %v382
      %v384 = vsel %vm381, %v383, %v379
      %v385 = vmul.f32 %v341, %v384
      %386 = vst.msk [vmem:[%s17] sm:$0xff] %vm321, %v370
      %387 = vst.msk [vmem:[%s17 + $0x8] sm:$0xff] %vm321, %v385
      %388 = vxpose.xlu0.b32.start [1/16] %v370, 128
      %389 = vxpose.xlu0.b32.cont [2/16] 0.0, 128
      %390 = vxpose.xlu0.b32.cont [3/16] 0.0, 128
      %391 = vxpose.xlu0.b32.cont [4/16] 0.0, 128
      %392 = vxpose.xlu0.b32.cont [5/16] 0.0, 128
      %393 = vxpose.xlu0.b32.cont [6/16] 0.0, 128
      %394 = vxpose.xlu0.b32.cont [7/16] 0.0, 128
      %395 = vxpose.xlu0.b32.cont [8/16] 0.0, 128
      %396 = vxpose.xlu0.b32.cont [9/16] 0.0, 128
      %397 = vxpose.xlu0.b32.cont [10/16] 0.0, 128
      %398 = vxpose.xlu0.b32.cont [11/16] 0.0, 128
      %399 = vxpose.xlu0.b32.cont [12/16] 0.0, 128
      %400 = vxpose.xlu0.b32.cont [13/16] 0.0, 128
      %401 = vxpose.xlu0.b32.cont [14/16] 0.0, 128
      %402 = vxpose.xlu0.b32.cont [15/16] 0.0, 128
      %403 = vxpose.xlu0.b32.end [16/16] 0.0, 128
      %v404 = vpop.trf.xlu0
      %v405 = vpop.trf.xlu0
      %v406 = vpop.trf.xlu0
      %v407 = vpop.trf.xlu0
      %v408 = vpop.trf.xlu0
      %v409 = vpop.trf.xlu0
      %v410 = vpop.trf.xlu0
      %v411 = vpop.trf.xlu0
      %v412 = vpop.trf.xlu0
      %v413 = vpop.trf.xlu0
      %v414 = vpop.trf.xlu0
      %v415 = vpop.trf.xlu0
      %v416 = vpop.trf.xlu0
      %v417 = vpop.trf.xlu0
      %v418 = vpop.trf.xlu0
      %v419 = vpop.trf.xlu0
      %vm420 = vcmask 64512
      %v422 = vsel %vm420, %v404, 0
      %424 = vmatpush.msra.mxu0 0.0
      %425 = vmatpush.msra.mxu0 0.0
      %426 = vmatpush.msra.mxu0 0.0
      %427 = vmatpush.msra.mxu0 0.0
      %428 = vmatpush.msra.mxu0 0.0
      %429 = vmatpush.msra.mxu0 0.0
      %430 = vmatpush.msra.mxu0 0.0
      %431 = vmatpush.msra.mxu0 0.0
      %432 = vmatpush.msra.mxu0 0.0
      %433 = vmatpush.msra.mxu0 0.0
      %434 = vmatpush.msra.mxu0 0.0
      %435 = vmatpush.msra.mxu0 0.0
      %436 = vmatpush.msra.mxu0 0.0
      %437 = vmatpush.msra.mxu0 0.0
      %438 = vmatpush.msra.mxu0 0.0
      %439 = vmatpush.msra.mxu0 %v199
      %440 = vmatmul.f32.gmra.mxu0 %v422
      %v441 = vpop.f32.mrf.mxu0
      %v442 = vadd.f32 0.0, %v441
      %443 = vdwg.mxu0
      %444 = vxpose.xlu0.b32.start [1/16] %v385, 128
      %445 = vxpose.xlu0.b32.cont [2/16] 0.0, 128
      %446 = vxpose.xlu0.b32.cont [3/16] 0.0, 128
      %447 = vxpose.xlu0.b32.cont [4/16] 0.0, 128
      %448 = vxpose.xlu0.b32.cont [5/16] 0.0, 128
      %449 = vxpose.xlu0.b32.cont [6/16] 0.0, 128
      %450 = vxpose.xlu0.b32.cont [7/16] 0.0, 128
      %451 = vxpose.xlu0.b32.cont [8/16] 0.0, 128
      %452 = vxpose.xlu0.b32.cont [9/16] 0.0, 128
      %453 = vxpose.xlu0.b32.cont [10/16] 0.0, 128
      %454 = vxpose.xlu0.b32.cont [11/16] 0.0, 128
      %455 = vxpose.xlu0.b32.cont [12/16] 0.0, 128
      %456 = vxpose.xlu0.b32.cont [13/16] 0.0, 128
      %457 = vxpose.xlu0.b32.cont [14/16] 0.0, 128
      %458 = vxpose.xlu0.b32.cont [15/16] 0.0, 128
      %459 = vxpose.xlu0.b32.end [16/16] 0.0, 128
      %v460 = vpop.trf.xlu0
      %v461 = vpop.trf.xlu0
      %v462 = vpop.trf.xlu0
      %v463 = vpop.trf.xlu0
      %v464 = vpop.trf.xlu0
      %v465 = vpop.trf.xlu0
      %v466 = vpop.trf.xlu0
      %v467 = vpop.trf.xlu0
      %v468 = vpop.trf.xlu0
      %v469 = vpop.trf.xlu0
      %v470 = vpop.trf.xlu0
      %v471 = vpop.trf.xlu0
      %v472 = vpop.trf.xlu0
      %v473 = vpop.trf.xlu0
      %v474 = vpop.trf.xlu0
      %v475 = vpop.trf.xlu0
      %v477 = vsel %vm420, %v460, 0
      %479 = vmatpush.msra.mxu0 0.0
      %480 = vmatpush.msra.mxu0 0.0
      %481 = vmatpush.msra.mxu0 0.0
      %482 = vmatpush.msra.mxu0 0.0
      %483 = vmatpush.msra.mxu0 0.0
      %484 = vmatpush.msra.mxu0 0.0
      %485 = vmatpush.msra.mxu0 0.0
      %486 = vmatpush.msra.mxu0 0.0
      %487 = vmatpush.msra.mxu0 0.0
      %488 = vmatpush.msra.mxu0 0.0
      %489 = vmatpush.msra.mxu0 0.0
      %490 = vmatpush.msra.mxu0 0.0
      %491 = vmatpush.msra.mxu0 0.0
      %492 = vmatpush.msra.mxu0 0.0
      %493 = vmatpush.msra.mxu0 0.0
      %494 = vmatpush.msra.mxu0 %v200
      %495 = vmatmul.f32.gmra.mxu0 %v477
      %v496 = vpop.f32.mrf.mxu0
      %v497 = vadd.f32 0.0, %v496
      %498 = vdwg.mxu0
      %s499 = smul.u32 1, 1
      %s500 = sshll.u32 %s499, 4
      %501 = dma.done [#allocation3], %s500
      %s502 = sshll.u32 %s499, 4
      %503 = dma.done %s163, %s502
      %v504 = vld [vmem:[#allocation2] sm:$0x3]
      %v507 = vrot.slane %v497, 7
      %vm508 = vcmask 1041409
      %v509 = vsel %vm508, %v507, %v442
      %510 = vrot.lane.b32.xlu0 %v509, 32
      %v511 = vpop.permute.xlu0 %510
      %514 = vrot.lane.b32.xlu0 %v198, 64
      %v515 = vpop.permute.xlu0 %514
      %v517 = vsel %vm219, %v504, %v511
      %vm518 = vcmask 523264
      %v519 = vsel %vm518, %v517, %v515
      %v520 = vpack.c.bf16 %v519, %v519
      %v521 = vld [vmem:[#allocation13] sm:$0xf]
      %v522 = vld [vmem:[#allocation13 + $0x4] sm:$0xf]
      %v523 = vld [vmem:[#allocation13 + $0x8] sm:$0xf]
      %v524 = vld [vmem:[#allocation13 + $0xc] sm:$0xf]
      %v525 = vld [vmem:[#allocation13 + $0x10] sm:$0xf]
      %v526 = vld [vmem:[#allocation13 + $0x14] sm:$0xf]
      %v527 = vld [vmem:[#allocation13 + $0x18] sm:$0xf]
      %v528 = vld [vmem:[#allocation13 + $0x1c] sm:$0xf]
      %v529 = vld [vmem:[#allocation13 + $0x20] sm:$0xf]
      %v530 = vld [vmem:[#allocation13 + $0x24] sm:$0xf]
      %v531 = vld [vmem:[#allocation13 + $0x28] sm:$0xf]
      %v532 = vld [vmem:[#allocation13 + $0x2c] sm:$0xf]
      %v533 = vld [vmem:[%s11] sm:$0x1]
      %v535 = vperm.slane %v533, 0
      %v549 = vunpack.c.l.b16 %v521
      %v550 = vunpack.c.l.b16 %v522
      %v551 = vunpack.c.l.b16 %v523
      %v552 = vunpack.c.l.b16 %v524
      %v553 = vunpack.c.l.b16 %v525
      %v554 = vunpack.c.l.b16 %v526
      %v555 = vunpack.c.l.b16 %v527
      %v556 = vunpack.c.l.b16 %v528
      %v557 = vunpack.c.l.b16 %v529
      %v558 = vunpack.c.l.b16 %v530
      %v559 = vunpack.c.l.b16 %v531
      %v560 = vunpack.c.l.b16 %v532
      %v561 = vpack.c.b16 %v550, %v549
      %v562 = vpack.c.b16 %v552, %v551
      %v563 = vpack.c.b16 %v554, %v553
      %v564 = vpack.c.b16 %v556, %v555
      %v565 = vpack.c.b16 %v558, %v557
      %v566 = vpack.c.b16 %v560, %v559
      %vm573 = vcmask 785408
      %v575 = vsel %vm573, %v520, 0
      %577 = vmatpush.bf16.msra.mxu0 0
      %578 = vmatpush.bf16.msra.mxu0 0
      %579 = vmatpush.bf16.msra.mxu0 %v566
      %580 = vmatpush.bf16.msra.mxu0 %v565
      %581 = vmatpush.bf16.msra.mxu0 %v564
      %582 = vmatpush.bf16.msra.mxu0 %v563
      %583 = vmatpush.bf16.msra.mxu0 %v562
      %584 = vmatpush.bf16.msra.mxu0 %v561
      %585 = vmatmul.bf16.gmra.mxu0 %v575
      %v586 = vpop.f32.mrf.mxu0
      %v587 = vadd.f32 %v535, %v586
      %v588 = vpop.f32.mrf.mxu0
      %589 = vdwg.mxu0
      %v590 = vxor.u32 %v587, 2147483648
      %v591 = vmul.f32 %v590, 1.442695
      %v592 = vpow.pop %v591
      %v593 = vadd.f32 %v592, 1.0
      %v594 = vrcp.pop %v593
      %v595 = vmul.f32 %v593, %v594
      %v596 = vsub.f32 1.0, %v595
      %v597 = vmul.f32 %v594, %v596
      %v598 = vadd.f32 %v594, %v597
      %vm599 = vweird.f32 %v593
      %vm600 = vweird.f32 %v594
      %vm601 = vmor %vm599, %vm600
      %v602 = vsel %vm601, %v594, %v598
      %v603 = vand.u32 2147483647, %v593
      %vm604 = vcmp.eq.f32.partialorder %v603, 8.507059e+37
      %v605 = vand.u32 %v593, 2147483648
      %v606 = vor.u32 1.1754944e-38, %v605
      %v607 = vsel %vm604, %v606, %v602
      %v608 = vmul.f32 1.0, %v607
      %v609 = vtanh.pop %v587
      %v610 = vld [vmem:[#allocation7] sm:$0x3]
      %612 = vrot.lane.b32.xlu0 %v610, 32
      %v613 = vpop.permute.xlu0 %612
      %v615 = vmul.f32 %v608, %v613
      %617 = vrot.lane.b32.xlu0 %v609, 64
      %v618 = vpop.permute.xlu0 %617
      %v620 = vmul.f32 %v608, %v618
      %622 = vrot.lane.b32.xlu0 %v620, 32
      %v623 = vpop.permute.xlu0 %622
      %v625 = vadd.f32 %v615, %v623
      %v626 = vtanh.pop %v625
      %628 = vrot.lane.b32.xlu0 %v626, 64
      %v629 = vpop.permute.xlu0 %628
      %v631 = vmul.f32 %v608, %v629
      %633 = vrot.lane.b32.xlu0 %v625, 96
      %v634 = vpop.permute.xlu0 %633
      %vm636 = vcmask 254976
      %637 = vst.msk [vmem:[#allocation18] sm:$0x3] %vm636, %v634
      %639 = vrot.lane.b32.xlu0 %v631, 32
      %v640 = vpop.permute.xlu0 %639
      %642 = vst.msk [vmem:[#allocation16] sm:$0x3] %vm636, %v640
    $region69: #{tpu_custom_call.1} parent=1 // pred_fallthru
      _
    %v643 = vld [vmem:[#allocation16] sm:$0x3]
    %v644 = vpack.c.bf16 %v643, %v643
    %v645 = vld [vmem:[%s12] sm:$0xf]
    %v646 = vld [vmem:[%s12 + $0x4] sm:$0xf]
    %v647 = vld [vmem:[%s12 + $0x8] sm:$0xf]
    %v648 = vld [vmem:[%s12 + $0xc] sm:$0xf]
    %v649 = vld [vmem:[%s13] sm:$0x1]
    %v651 = vperm.slane %v649, 0
    %v657 = vunpack.c.l.b16 %v645
    %v658 = vunpack.c.l.b16 %v646
    %v659 = vunpack.c.l.b16 %v647
    %v660 = vunpack.c.l.b16 %v648
    %v661 = vpack.c.b16 %v658, %v657
    %v662 = vpack.c.b16 %v660, %v659
    %vm665 = vcmask 261120
    %v667 = vsel %vm665, %v644, 0
    %669 = vmatpush.bf16.msra.mxu0 0
    %670 = vmatpush.bf16.msra.mxu0 0
    %671 = vmatpush.bf16.msra.mxu0 0
    %672 = vmatpush.bf16.msra.mxu0 0
    %673 = vmatpush.bf16.msra.mxu0 0
    %674 = vmatpush.bf16.msra.mxu0 0
    %675 = vmatpush.bf16.msra.mxu0 %v662
    %676 = vmatpush.bf16.msra.mxu0 %v661
    %677 = vmatmul.bf16.gmra.mxu0 %v667
    %v678 = vpop.f32.mrf.mxu0
    %v679 = vadd.f32 %v651, %v678
    %v680 = vpop.f32.mrf.mxu0
    %681 = vdwg.mxu0
    %vm682 = vcmask 123904
    %683 = vst.msk [vmem:[#allocation15] sm:$0x3] %vm682, %v679
    // Predicated region
    $region130: #{tpu_custom_call.1} parent=1 // pred_check
      _
    $region131: #{tpu_custom_call.1} parent=1 // pred_check_branch
      %685 = sbr.rel (0) target = $region133
    $region132: #{tpu_custom_call.1} parent=1 // pred_region
      %687 = vsyncadd [#allocation9], 0
      %s689 = sshll.u32 [#allocation15], 4
      %s690 = int_to_ptr.vmem [resolvable:$true] %s689
      %s691 = sshll.u32 %s14, 4
      %s692 = int_to_ptr.hbm [resolvable:$true] %s691
      %694 = dma.vmem_to_hbm [thread:$0]  %s690, 32, %s692, [#allocation9]
    $region133: #{tpu_custom_call.1} parent=1 // pred_fallthru
      _
    // Predicated region
    $region134: #{tpu_custom_call.1} parent=1 // pred_check
      _
    $region135: #{tpu_custom_call.1} parent=1 // pred_check_branch
      %696 = sbr.rel (0) target = $region137
    $region136: #{tpu_custom_call.1} parent=1 // pred_region
      %698 = vsyncadd [#allocation17], 0
      %s700 = sshll.u32 [#allocation16], 4
      %s701 = int_to_ptr.vmem [resolvable:$true] %s700
      %s702 = sshll.u32 %s15, 4
      %s703 = int_to_ptr.hbm [resolvable:$true] %s702
      %705 = dma.vmem_to_hbm [thread:$0]  %s701, 32, %s703, [#allocation17]
    $region137: #{tpu_custom_call.1} parent=1 // pred_fallthru
      _
    // Predicated region
    $region138: #{tpu_custom_call.1} parent=1 // pred_check
      _
    $region139: #{tpu_custom_call.1} parent=1 // pred_check_branch
      %707 = sbr.rel (0) target = $region141
    $region140: #{tpu_custom_call.1} parent=1 // pred_region
      %709 = vsyncadd [#allocation17], 0
      %s711 = sshll.u32 [#allocation18], 4
      %s712 = int_to_ptr.vmem [resolvable:$true] %s711
      %s713 = sshll.u32 %s16, 4
      %s714 = int_to_ptr.hbm [resolvable:$true] %s713
      %716 = dma.vmem_to_hbm [thread:$0]  %s712, 32, %s714, [#allocation17]
    $region141: #{tpu_custom_call.1} parent=1 // pred_fallthru
      _
    // Predicated region
    $region142: #{tpu_custom_call.1} parent=1 // pred_check
      _
    $region143: #{tpu_custom_call.1} parent=1 // pred_check_branch
      %718 = sbr.rel (0) target = $region145
    $region144: #{tpu_custom_call.1} parent=1 // pred_region
      _
    $region145: #{tpu_custom_call.1} parent=1 // pred_fallthru
      _
    // Predicated region
    $region146: #{tpu_custom_call.1} parent=1 // pred_check
      _
    $region147: #{tpu_custom_call.1} parent=1 // pred_check_branch
      %720 = sbr.rel (0) target = $region149
    $region148: #{tpu_custom_call.1} parent=1 // pred_region
      %722 = dma.done [#allocation9], 32
    $region149: #{tpu_custom_call.1} parent=1 // pred_fallthru
      _
    // Predicated region
    $region150: #{tpu_custom_call.1} parent=1 // pred_check
      _
    $region151: #{tpu_custom_call.1} parent=1 // pred_check_branch
      %724 = sbr.rel (0) target = $region153
    $region152: #{tpu_custom_call.1} parent=1 // pred_region
      %726 = dma.done [#allocation17], 32
    $region153: #{tpu_custom_call.1} parent=1 // pred_fallthru
      _
    // Predicated region
    $region154: #{tpu_custom_call.1} parent=1 // pred_check
      _
    $region155: #{tpu_custom_call.1} parent=1 // pred_check_branch
      %728 = sbr.rel (0) target = $region157
    $region156: #{tpu_custom_call.1} parent=1 // pred_region
      %730 = dma.done [#allocation17], 32
    $region157: #{tpu_custom_call.1} parent=1 // pred_fallthru
      _
    // Predicated region
    $region158: #{tpu_custom_call.1} parent=1 // pred_check
      _
    $region159: #{tpu_custom_call.1} parent=1 // pred_check_branch
      %732 = sbr.rel (0) target = $region161
    $region160: #{tpu_custom_call.1} parent=1 // pred_region
      _
    $region161: #{tpu_custom_call.1} parent=1 // pred_fallthru
      _
    %733 = vsyncpa [#allocation8], 1
    %734 = vsyncpa [#allocation11], 1
    %735 = vsyncpa [#allocation14], 1
    %736 = vsyncpa [#allocation9], 1
    %737 = vsyncpa [#allocation17], 1
  %738 = vsyncmov [#allocation3]
  %s739 = vpop.sfrf %738
  %p740 = scmp.eq.s32.totalorder %s739, 0
  %p741 = pneg %p740
  %743 = shalt.err (%p741)
  %s744 = scalar_lea.sflag [#allocation3], 1
  %745 = vsyncmov %s744
  %s746 = vpop.sfrf %745
  %p747 = scmp.eq.s32.totalorder %s746, 0
  %p748 = pneg %p747
  %750 = shalt.err (%p748)

</llo_original>
